<compile_context>
chip_gen: v5e
topology: v5e:2x2
jax: 0.10.0
libtpu: 0.0.40
codegen_flags: <defaults>
</compile_context>

<pallas_src>
import math
import functools

import numpy as np
import jax
import jax.numpy as jnp
from jax.experimental import pallas as pl
from jax.experimental.pallas import tpu as pltpu


# ------------------------------------------------------------------ coefficients
def _cheby(i, x):
    """Chebyshev polynomial T_i(x) for scalar x."""
    if i == 0:
        return 1.0
    t0, t1 = 1.0, x
    for _ in range(2, i + 1):
        t0, t1 = t1, 2.0 * x * t1 - t0
    return t1


def chebnetii_coefficients(K):
    """ChebnetII_prop.reset_parameters (Init=True) + forward-time interpolation."""
    xs = [math.cos((K - j + 0.5) * math.pi / (K + 1)) for j in range(K + 1)]
    coe_tmp = [max(v * v, 0.0) for v in xs]          # F.relu(temp), temp[j] = x_j**2
    coe = []
    for i in range(K + 1):
        c = sum(coe_tmp[j] * _cheby(i, xs[j]) for j in range(K + 1))
        coe.append(2.0 * c / (K + 1))
    return coe


# ------------------------------------------------------------------ helpers
def _round_up(v, m):
    return (v + m - 1) // m * m


def _vmem_capacity():
    try:
        return int(pltpu.get_tpu_info().vmem_capacity_bytes)
    except Exception:
        return 64 << 20          # conservative default (v7x per-core VMEM)


# ------------------------------------------------------------------ stage 1: lin1
def _lin1_kernel(x_ref, w1_ref, b1_ref, h_ref):
    h = jnp.dot(x_ref[...], w1_ref[...], preferred_element_type=jnp.float32)
    h_ref[...] = jnp.maximum(h + b1_ref[...], 0.0)


# ------------------------------------------------------------------ stage 2: propagation
def _prop_kernel(coe_ref, h_ref, p_ref, w2_ref, b2_ref, out_ref,
                 tx_ref, acc_ref, psum_ref, *, K, TR, TC, Np, NBc):
    s = pl.program_id(0)          # Chebyshev step: this sweep produces Tx_{s+1}
    i = pl.program_id(1)          # output node-row block
    j = pl.program_id(2)          # reduction node-column block (innermost)

    row = pl.multiple_of(i * TR, TR)
    col = pl.multiple_of(j * TC, TC)

    def tx_rows(slot, start, size):
        return pl.ds(pl.multiple_of(slot * Np + start, 128), size)

    # ---- prologue (first column sweep of step 0): seed Tx_0 = h --------------
    @pl.when(jnp.logical_and(s == 0, i == 0))
    def _():
        tx_ref[tx_rows(0, col, TC), :] = h_ref[...]

    # ---- reduction over column blocks: psum += P[i, j] @ Tx_s[j] -------------
    operand = tx_ref[tx_rows(s & 1, col, TC), :].astype(p_ref.dtype)
    contrib = jnp.dot(p_ref[...], operand, preferred_element_type=jnp.float32)

    if NBc == 1:                  # resident regime: skip the psum round-trip
        def read_psum():
            return contrib
    else:
        @pl.when(j == 0)
        def _():
            psum_ref[...] = jnp.zeros_like(psum_ref)
        psum_ref[...] += contrib

        def read_psum():
            return psum_ref[...]

    # ---- reduction finished for this row block --------------------------------
    @pl.when(j == NBc - 1)
    def _():
        psum = read_psum()
        cur = (s + 1) & 1         # ping-pong slot of Tx_{s+1} (holds Tx_{s-1})

        @pl.when(s == 0)
        def _():
            tx_ref[tx_rows(1, row, TR), :] = psum              # Tx_1 = P @ Tx_0
            acc_ref[pl.ds(row, TR), :] = (
                (0.5 * coe_ref[0]) * tx_ref[tx_rows(0, row, TR), :]
                + coe_ref[1] * psum)

        @pl.when(s > 0)
        def _():
            # Tx_{s+1} = 2 P Tx_s - Tx_{s-1}
            new_tx = 2.0 * psum - tx_ref[tx_rows(cur, row, TR), :]
            tx_ref[tx_rows(cur, row, TR), :] = new_tx
            acc_ref[pl.ds(row, TR), :] = (acc_ref[pl.ds(row, TR), :]
                                          + coe_ref[s + 1] * new_tx)

        # ---- epilogue on the last Chebyshev step: lin2 + log_softmax ----------
        @pl.when(s == K - 1)
        def _():
            logits = jnp.dot(acc_ref[pl.ds(row, TR), :], w2_ref[...],
                             preferred_element_type=jnp.float32) + b2_ref[...]
            m = jnp.max(logits, axis=1, keepdims=True)
            lse = m + jnp.log(jnp.sum(jnp.exp(logits - m), axis=1, keepdims=True))
            out_ref[...] = (logits - lse).astype(out_ref.dtype)


# ------------------------------------------------------------------ wrapper
def chebnetii_forward(x, w1, b1, w2, b2, P, coe, K, *,
                      p_dtype=jnp.bfloat16, tile_rows=None, tile_cols=None):
    """ChebNetII_V forward (eval mode) as two Pallas TPU kernel calls."""
    assert K >= 1 and len(coe) == K + 1
    N, F = x.shape
    H = w1.shape[1]
    C = w2.shape[1]

    Fp, Hp, Cp = (_round_up(d, 128) for d in (F, H, C))
    pbytes = np.dtype(p_dtype).itemsize
    Np0 = _round_up(N, 128)

    cap = _vmem_capacity()
    budget = max(cap - (24 << 20), 24 << 20)

    # Operand blocks are double-buffered by the BlockSpec pipeline; accounted 2x.
    def planned_vmem(TR, TC, Np):
        scratch = (2 * Np * Hp + Np * Hp + TR * Hp) * 4              # tx, acc, psum
        blocks = 2 * (TR * TC * pbytes + TC * Hp * 4 + TR * Cp * 4)  # P, h, out
        weights = 2 * (Hp * Cp + Cp) * 4                             # W2, b2
        return scratch + blocks + weights

    # ---- tile planning: pick tiles first, then pad Np up to them --------------
    if tile_rows is not None or tile_cols is not None:
        TR = int(tile_rows or tile_cols)
        TC = int(tile_cols or tile_rows)
        Np = _round_up(N, math.lcm(TR, TC))
    elif planned_vmem(Np0, Np0, Np0) <= budget:
        TR = TC = Np = Np0                     # P fully VMEM-resident across all K steps
    else:
        best = None
        for tr in (512, 256, 128):
            if tr > Np0:
                continue
            for tc in (4096, 2048, 1024, 512, 256, 128):
                if tc > Np0:
                    continue
                np_c = _round_up(N, max(tr, tc))
                if np_c * np_c > 1.7 * Np0 * Np0:        # cap padded-P blow-up
                    continue
                if planned_vmem(tr, tc, np_c) > budget:
                    continue
                key = (tc, tr)                           # widest TC, then widest TR
                if best is None or key > best[0]:
                    best = (key, tr, tc, np_c)
        if best is None:
            # TODO(synk): graphs whose Np*Hp carries exceed VMEM need the per-step
            # pallas_call / HBM-carry restructuring (esp. v7x); smallest tiles used.
            TR = TC = 128
            Np = Np0
        else:
            _, TR, TC, Np = best

    NBr, NBc = Np // TR, Np // TC
    vmem_limit = int(min(planned_vmem(TR, TC, Np) + (8 << 20), cap - (2 << 20)))

    # ---- lane/sublane-dense zero padding ---------------------------------------
    xp = jnp.zeros((Np, Fp), jnp.float32).at[:N, :F].set(x)
    Pp = jnp.zeros((Np, Np), jnp.float32).at[:N, :N].set(P).astype(p_dtype)
    w1p = jnp.zeros((Fp, Hp), jnp.float32).at[:F, :H].set(w1)
    b1p = jnp.zeros((1, Hp), jnp.float32).at[0, :H].set(b1)
    w2p = jnp.zeros((Hp, Cp), jnp.float32).at[:H, :C].set(w2)
    # -1e30 bias on padded class lanes -> their exp underflows to 0, so the
    # log_softmax over the padded 128-lane row is exact for the real classes.
    b2p = jnp.full((1, Cp), -1e30, jnp.float32).at[0, :C].set(b2)
    coe_arr = jnp.asarray(coe, jnp.float32)

    # ---- stage 1: h = relu(x @ W1 + b1) ----------------------------------------
    TL = max(t for t in (512, 256, 128) if Np % t == 0)
    lin1_vmem = int(2 * (TL * Fp + Fp * Hp + Hp + TL * Hp) * 4) + (4 << 20)
    h = pl.pallas_call(
        _lin1_kernel,
        out_shape=jax.ShapeDtypeStruct((Np, Hp), jnp.float32),
        grid_spec=pltpu.PrefetchScalarGridSpec(
            num_scalar_prefetch=0,
            grid=(Np // TL,),
            in_specs=[
                pl.BlockSpec((TL, Fp), lambda r: (r, 0)),
                pl.BlockSpec((Fp, Hp), lambda r: (0, 0)),
                pl.BlockSpec((1, Hp), lambda r: (0, 0)),
            ],
            out_specs=pl.BlockSpec((TL, Hp), lambda r: (r, 0)),
        ),
        compiler_params=pltpu.CompilerParams(
            dimension_semantics=("parallel",),
            vmem_limit_bytes=min(lin1_vmem, cap - (2 << 20)),
        ),
    )(xp, w1p, b1p)

    # ---- stage 2: Chebyshev propagation + lin2 + log_softmax -------------------
    kernel = functools.partial(_prop_kernel, K=K, TR=TR, TC=TC, Np=Np, NBc=NBc)

    out_padded = pl.pallas_call(
        kernel,
        out_shape=jax.ShapeDtypeStruct((Np, Cp), jnp.float32),
        grid_spec=pltpu.PrefetchScalarGridSpec(
            num_scalar_prefetch=1,                 # coe -> SMEM coefficient table
            grid=(K, NBr, NBc),
            in_specs=[
                # h: node block j only while Tx_0 is being seeded (s==0, i==0);
                # a constant block afterwards so it is not re-DMA'd every step.
                pl.BlockSpec(
                    (TC, Hp),
                    lambda s, i, j, coe: (
                        jnp.where(jnp.logical_and(s == 0, i == 0), j, 0), 0)),
                pl.BlockSpec((TR, TC), lambda s, i, j, coe: (i, j)),   # P tiles
                pl.BlockSpec((Hp, Cp), lambda s, i, j, coe: (0, 0)),   # W2 (resident)
                pl.BlockSpec((1, Cp), lambda s, i, j, coe: (0, 0)),    # b2 (resident)
            ],
            # Output block index only advances on the last Chebyshev step, so no
            # HBM writebacks of uninitialised blocks happen for s < K-1.
            out_specs=pl.BlockSpec(
                (TR, Cp),
                lambda s, i, j, coe: (jnp.where(s == K - 1, i, 0), 0)),
            scratch_shapes=[
                pltpu.VMEM((2 * Np, Hp), jnp.float32),   # Tx ping-pong carries
                pltpu.VMEM((Np, Hp), jnp.float32),       # coefficient accumulator
                pltpu.VMEM((TR, Hp), jnp.float32),       # P @ Tx partial sum
            ],
        ),
        compiler_params=pltpu.CompilerParams(
            # Row-block axis stays sequential: every row block of step s reads
            # ALL row blocks of Tx_{s-1} from the shared VMEM carry.
            dimension_semantics=("arbitrary", "arbitrary", "arbitrary"),
            vmem_limit_bytes=vmem_limit,
        ),
    )(coe_arr, h, Pp, w2p, b2p)

    return out_padded[:N, :C]


# ------------------------------------------------------------------ pure-JAX reference
def ref_forward(x, w1, b1, w2, b2, P, coe, K):
    coe = jnp.asarray(coe, jnp.float32)
    h = jnp.maximum(x @ w1 + b1, 0.0)
    tx0, tx1 = h, P @ h
    acc = coe[0] / 2.0 * tx0 + coe[1] * tx1
    for i in range(2, K + 1):
        tx2 = 2.0 * (P @ tx1) - tx0
        acc = acc + coe[i] * tx2
        tx0, tx1 = tx1, tx2
    logits = acc @ w2 + b2
    return jax.nn.log_softmax(logits, axis=1)


# ------------------------------------------------------------------ main
if __name__ == "__main__":
    def build_inputs(N, F, H, C):
        key = jax.random.PRNGKey(0)
        kx, ka, kw1, kb1, kw2, kb2 = jax.random.split(key, 6)
        x = jax.random.normal(kx, (N, F), dtype=jnp.float32)
        # Synthetic undirected graph -> dense propagation P = -(D^-1/2 A D^-1/2)
        probs = jax.random.uniform(ka, (N, N))
        upper = jnp.triu((probs < 0.1).astype(jnp.float32), k=1)
        A = upper + upper.T
        deg = jnp.sum(A, axis=1)
        dinv = jnp.where(deg > 0, 1.0 / jnp.sqrt(jnp.maximum(deg, 1e-12)), 0.0)
        P = -(dinv[:, None] * A * dinv[None, :])
        bnd1 = 1.0 / math.sqrt(F)
        w1 = jax.random.uniform(kw1, (F, H), minval=-bnd1, maxval=bnd1, dtype=jnp.float32)
        b1 = jax.random.uniform(kb1, (H,), minval=-bnd1, maxval=bnd1, dtype=jnp.float32)
        bnd2 = 1.0 / math.sqrt(H)
        w2 = jax.random.uniform(kw2, (H, C), minval=-bnd2, maxval=bnd2, dtype=jnp.float32)
        b2 = jax.random.uniform(kb2, (C,), minval=-bnd2, maxval=bnd2, dtype=jnp.float32)
        return x, w1, b1, w2, b2, P

    def run_case(N, F, H, C, K, *, p_dtype=jnp.bfloat16, tile_rows=None,
                 tile_cols=None, atol=1e-3, rtol=1e-3, tag=""):
        x, w1, b1, w2, b2, P = build_inputs(N, F, H, C)
        coe = chebnetii_coefficients(K)
        out = chebnetii_forward(x, w1, b1, w2, b2, P, coe, K, p_dtype=p_dtype,
                                tile_rows=tile_rows, tile_cols=tile_cols)
        out = jax.block_until_ready(out)
        ref = ref_forward(x, w1, b1, w2, b2, P, coe, K)
        assert out.shape == (N, C), tag
        err = float(jnp.max(jnp.abs(out - ref)))
        assert jnp.allclose(out, ref, atol=atol, rtol=rtol), \
            f"mismatch {tag}: max_abs_err={err}"

    # 1) resident-P regime (NBr == NBc == 1), exact f32 P stream.
    run_case(64, 16, 32, 8, 5, p_dtype=jnp.float32, tag="f32 resident")
    # 2) square-tiled path (forced 128x128 -> 2x2 blocks): exercises the gridded
    #    reduction, ping-pong carries and the seeded Tx_0 prologue.
    run_case(200, 16, 32, 8, 4, p_dtype=jnp.float32, tile_rows=128, tile_cols=128,
             tag="f32 tiled")
    # 3) rectangular tiles (TR=128 rows, TC=256 cols) with awkward N / C.
    run_case(300, 24, 48, 7, 3, p_dtype=jnp.float32, tile_rows=128, tile_cols=256,
             tag="f32 rect tiles")
    # 4) default bf16-streamed P (halved HBM traffic), f32 accumulation.
    run_case(96, 16, 32, 8, 5, atol=1e-1, rtol=1e-1, tag="bf16 P")

    print("KERNEL_OK")
</pallas_src>

<mosaic_0001>
module attributes {stable_mosaic.version = 11 : i64} {
  func.func @_lin1_kernel(%arg0: i32, %arg1: memref<128x128xf32, #tpu.memory_space<vmem>>, %arg2: memref<128x128xf32, #tpu.memory_space<vmem>>, %arg3: memref<1x128xf32, #tpu.memory_space<vmem>>, %arg4: memref<128x128xf32, #tpu.memory_space<vmem>>) attributes {dimension_semantics = [#tpu.dimension_semantics<parallel>], iteration_bounds = array<i64: 1>, scalar_prefetch = 0 : i64, scratch_operands = 0 : i64, tpu.core_type = #tpu.core_type<tc>, window_params = [{transform_indices = @transform_0, window_bounds = array<i64: 128, 128>}, {pipeline_mode = #tpu.pipeline_mode<synchronous>, transform_indices = @transform_1, window_bounds = array<i64: 128, 128>}, {pipeline_mode = #tpu.pipeline_mode<synchronous>, transform_indices = @transform_2, window_bounds = array<i64: 1, 128>}, {transform_indices = @transform_3, window_bounds = array<i64: 128, 128>}]} {
    %c0 = arith.constant 0 : index
    %c0_0 = arith.constant 0 : index
    %0 = vector.load %arg1[%c0, %c0_0] : memref<128x128xf32, #tpu.memory_space<vmem>>, vector<128x128xf32>
    %c0_1 = arith.constant 0 : index
    %c0_2 = arith.constant 0 : index
    %1 = vector.load %arg2[%c0_1, %c0_2] : memref<128x128xf32, #tpu.memory_space<vmem>>, vector<128x128xf32>
    %cst = arith.constant dense<0.000000e+00> : vector<128x128xf32>
    %2 = tpu.matmul %0, %1, %cst {dimension_numbers = #tpu.dot_dimension_numbers<[1], [0], [0], [1], [0, 0, 1, 1], [], []>} : vector<128x128xf32>, vector<128x128xf32>, vector<128x128xf32> -> vector<128x128xf32>
    %c0_3 = arith.constant 0 : index
    %c0_4 = arith.constant 0 : index
    %3 = vector.load %arg3[%c0_3, %c0_4] : memref<1x128xf32, #tpu.memory_space<vmem>>, vector<1x128xf32>
    %4 = vector.broadcast %3 : vector<1x128xf32> to vector<128x128xf32>
    %5 = arith.addf %2, %4 : vector<128x128xf32>
    %cst_5 = arith.constant 0.000000e+00 : f32
    %6 = vector.broadcast %cst_5 : f32 to vector<128x128xf32>
    %7 = arith.maximumf %5, %6 : vector<128x128xf32>
    %c0_6 = arith.constant 0 : index
    %c0_7 = arith.constant 0 : index
    %8 = vector.load %arg4[%c0_6, %c0_7] : memref<128x128xf32, #tpu.memory_space<vmem>>, vector<128x128xf32>
    tpu.vector_store %arg4[%c0_6, %c0_7], %7 {strides = array<i32>} : memref<128x128xf32, #tpu.memory_space<vmem>>, vector<128x128xf32>,
    return
  }
  func.func @transform_0(%arg0: i32) -> (i32, i32) {
    %c0_i32 = arith.constant 0 : i32
    %c0_i32_0 = arith.constant 0 : i32
    return %arg0, %c0_i32 : i32, i32
  }
  func.func @transform_1(%arg0: i32) -> (i32, i32) {
    %c0_i32 = arith.constant 0 : i32
    %c0_i32_0 = arith.constant 0 : i32
    %c0_i32_1 = arith.constant 0 : i32
    return %c0_i32, %c0_i32_0 : i32, i32
  }
  func.func @transform_2(%arg0: i32) -> (i32, i32) {
    %c0_i32 = arith.constant 0 : i32
    %c0_i32_0 = arith.constant 0 : i32
    %c0_i32_1 = arith.constant 0 : i32
    return %c0_i32, %c0_i32_0 : i32, i32
  }
  func.func @transform_3(%arg0: i32) -> (i32, i32) {
    %c0_i32 = arith.constant 0 : i32
    %c0_i32_0 = arith.constant 0 : i32
    return %arg0, %c0_i32 : i32, i32
  }
}

</mosaic_0001>

<llo_original>
// kernel: tpu_custom_call.1
$region0: #{tpu_custom_call.1}
  #allocation0 [shape = 'u32[]', space=smem, size = 0x4, offset = 0x4, fixed_abs, tag = 'smem constant byte address 0x4 - core index']
  #allocation1 [shape = 'u32[72,128]{1,0:T(1,128)}', space=vmem, size = 0x9000, scoped, tag = 'internal scratch']
  %s0 = inlined_call_operand.hbm [shape: f32[128,128], index: 0, kind: input, shape index: {}]
  %s1 = inlined_call_operand.hbm [shape: f32[128,128], index: 1, kind: input, shape index: {}]
  %s2 = inlined_call_operand.vmem [shape: f32[1,128], index: 2, kind: input, shape index: {}]
  %s3 = inlined_call_operand.hbm [shape: f32[128,128], index: 3, kind: output, shape index: {}]
  %s4 = sld [smem:[#allocation0]]
  $region30: #{tpu_custom_call.1} parent=0
    _
  %s6 = ssub.s32 1, %s4
  %s7 = scalar_select 0, %s6, %s4
  $region1: #{tpu_custom_call.1} parent=0
    #allocation2 [shape = 'u8[65536]{0}', space=vmem, size = 0x10000, scoped, tag = 'input window, operand 0, single buffered']
    #allocation3 [shape = 's32[1]{0}', space=sflag, size = 0x4, scoped, tag = 'scoped memory for tpu_custom_call.1']
    #allocation4 [shape = 's32[1]{0}', space=sflag, size = 0x4, scoped, tag = 'scoped memory for tpu_custom_call.1']
    #allocation5 [shape = 'u8[65536]{0}', space=vmem, size = 0x10000, scoped, tag = 'input window, operand 1, single buffered']
    #allocation6 [shape = 's32[1]{0}', space=sflag, size = 0x4, scoped, tag = 'scoped memory for tpu_custom_call.1']
    #allocation7 [shape = 'u8[65536]{0}', space=vmem, size = 0x10000, scoped, tag = 'output window, operand 0, single buffered']
    %8 = vsyncpa [#allocation3], 0
    %9 = vsyncpa [#allocation6], 0
    %10 = vsyncpa [#allocation4], 0
    // Predicated region
    $region2: #{tpu_custom_call.1} parent=1 // pred_check
      _
    $region3: #{tpu_custom_call.1} parent=1 // pred_check_branch
      %12 = sbr.rel (0) target = $region5
    $region4: #{tpu_custom_call.1} parent=1 // pred_region
      %14 = vsyncadd [#allocation3], 0
      %s15 = sshll.u32 %s0, 4
      %s16 = int_to_ptr.hbm [resolvable:$true] %s15
      %s17 = sshll.u32 [#allocation2], 4
      %s18 = int_to_ptr.vmem [resolvable:$true] %s17
      %23 = dma.hbm_to_vmem [thread:$0]  %s16, 2048, %s18, [#allocation3], 128, 128, 8
    $region5: #{tpu_custom_call.1} parent=1 // pred_fallthru
      _
    // Predicated region
    $region6: #{tpu_custom_call.1} parent=1 // pred_check
      _
    $region7: #{tpu_custom_call.1} parent=1 // pred_check_branch
      %25 = sbr.rel (0) target = $region9
    $region8: #{tpu_custom_call.1} parent=1 // pred_region
      %27 = vsyncadd [#allocation6], 0
      %s28 = sshll.u32 %s1, 4
      %s29 = int_to_ptr.hbm [resolvable:$true] %s28
      %s30 = sshll.u32 [#allocation5], 4
      %s31 = int_to_ptr.vmem [resolvable:$true] %s30
      %36 = dma.hbm_to_vmem [thread:$0]  %s29, 2048, %s31, [#allocation6], 128, 128, 8
    $region9: #{tpu_custom_call.1} parent=1 // pred_fallthru
      _
    // Predicated region
    $region10: #{tpu_custom_call.1} parent=1 // pred_check
      _
    $region11: #{tpu_custom_call.1} parent=1 // pred_check_branch
      %38 = sbr.rel (0) target = $region13
    $region12: #{tpu_custom_call.1} parent=1 // pred_region
      _
    $region13: #{tpu_custom_call.1} parent=1 // pred_fallthru
      _
    // Predicated region
    $region14: #{tpu_custom_call.1} parent=1 // pred_check
      _
    $region15: #{tpu_custom_call.1} parent=1 // pred_check_branch
      %40 = sbr.rel (0) target = $region17
    $region16: #{tpu_custom_call.1} parent=1 // pred_region
      %42 = dma.done [#allocation3], 2048
    $region17: #{tpu_custom_call.1} parent=1 // pred_fallthru
      _
    // Predicated region
    $region18: #{tpu_custom_call.1} parent=1 // pred_check
      _
    $region19: #{tpu_custom_call.1} parent=1 // pred_check_branch
      %44 = sbr.rel (0) target = $region21
    $region20: #{tpu_custom_call.1} parent=1 // pred_region
      %46 = dma.done [#allocation6], 2048
    $region21: #{tpu_custom_call.1} parent=1 // pred_fallthru
      _
    %v47 = vld [vmem:[#allocation2] sm:$0xff]
    %v48 = vld [vmem:[#allocation2 + $0x8] sm:$0xff]
    %v49 = vld [vmem:[#allocation2 + $0x10] sm:$0xff]
    %v50 = vld [vmem:[#allocation2 + $0x18] sm:$0xff]
    %v51 = vld [vmem:[#allocation2 + $0x20] sm:$0xff]
    %v52 = vld [vmem:[#allocation2 + $0x28] sm:$0xff]
    %v53 = vld [vmem:[#allocation2 + $0x30] sm:$0xff]
    %v54 = vld [vmem:[#allocation2 + $0x38] sm:$0xff]
    %v55 = vld [vmem:[#allocation2 + $0x40] sm:$0xff]
    %v56 = vld [vmem:[#allocation2 + $0x48] sm:$0xff]
    %v57 = vld [vmem:[#allocation2 + $0x50] sm:$0xff]
    %v58 = vld [vmem:[#allocation2 + $0x58] sm:$0xff]
    %v59 = vld [vmem:[#allocation2 + $0x60] sm:$0xff]
    %v60 = vld [vmem:[#allocation2 + $0x68] sm:$0xff]
    %v61 = vld [vmem:[#allocation2 + $0x70] sm:$0xff]
    %v62 = vld [vmem:[#allocation2 + $0x78] sm:$0xff]
    %v63 = vld [vmem:[#allocation5] sm:$0xff]
    %v64 = vld [vmem:[#allocation5 + $0x8] sm:$0xff]
    %v65 = vld [vmem:[#allocation5 + $0x10] sm:$0xff]
    %v66 = vld [vmem:[#allocation5 + $0x18] sm:$0xff]
    %v67 = vld [vmem:[#allocation5 + $0x20] sm:$0xff]
    %v68 = vld [vmem:[#allocation5 + $0x28] sm:$0xff]
    %v69 = vld [vmem:[#allocation5 + $0x30] sm:$0xff]
    %v70 = vld [vmem:[#allocation5 + $0x38] sm:$0xff]
    %v71 = vld [vmem:[#allocation5 + $0x40] sm:$0xff]
    %v72 = vld [vmem:[#allocation5 + $0x48] sm:$0xff]
    %v73 = vld [vmem:[#allocation5 + $0x50] sm:$0xff]
    %v74 = vld [vmem:[#allocation5 + $0x58] sm:$0xff]
    %v75 = vld [vmem:[#allocation5 + $0x60] sm:$0xff]
    %v76 = vld [vmem:[#allocation5 + $0x68] sm:$0xff]
    %v77 = vld [vmem:[#allocation5 + $0x70] sm:$0xff]
    %v78 = vld [vmem:[#allocation5 + $0x78] sm:$0xff]
    %v79 = vld [vmem:[%s2] sm:$0x1]
    %v81 = vperm.slane %v79, 0
    %83 = vmatpush.msra.mxu0 %v78
    %84 = vmatpush.msra.mxu0 %v77
    %85 = vmatpush.msra.mxu0 %v76
    %86 = vmatpush.msra.mxu0 %v75
    %87 = vmatpush.msra.mxu0 %v74
    %88 = vmatpush.msra.mxu0 %v73
    %89 = vmatpush.msra.mxu0 %v72
    %90 = vmatpush.msra.mxu0 %v71
    %91 = vmatpush.msra.mxu0 %v70
    %92 = vmatpush.msra.mxu0 %v69
    %93 = vmatpush.msra.mxu0 %v68
    %94 = vmatpush.msra.mxu0 %v67
    %95 = vmatpush.msra.mxu0 %v66
    %96 = vmatpush.msra.mxu0 %v65
    %97 = vmatpush.msra.mxu0 %v64
    %98 = vmatpush.msra.mxu0 %v63
    %99 = vmatmul.f32.gmra.mxu0 %v47
    %v100 = vpop.f32.mrf.mxu0
    %v101 = vadd.f32 %v81, %v100
    %102 = vmatmul.f32.gmra.mxu0 %v48
    %v103 = vpop.f32.mrf.mxu0
    %v104 = vadd.f32 %v81, %v103
    %105 = vmatmul.f32.gmra.mxu0 %v49
    %v106 = vpop.f32.mrf.mxu0
    %v107 = vadd.f32 %v81, %v106
    %108 = vmatmul.f32.gmra.mxu0 %v50
    %v109 = vpop.f32.mrf.mxu0
    %v110 = vadd.f32 %v81, %v109
    %111 = vmatmul.f32.gmra.mxu0 %v51
    %v112 = vpop.f32.mrf.mxu0
    %v113 = vadd.f32 %v81, %v112
    %114 = vmatmul.f32.gmra.mxu0 %v52
    %v115 = vpop.f32.mrf.mxu0
    %v116 = vadd.f32 %v81, %v115
    %117 = vmatmul.f32.gmra.mxu0 %v53
    %v118 = vpop.f32.mrf.mxu0
    %v119 = vadd.f32 %v81, %v118
    %120 = vmatmul.f32.gmra.mxu0 %v54
    %v121 = vpop.f32.mrf.mxu0
    %v122 = vadd.f32 %v81, %v121
    %123 = vmatmul.f32.gmra.mxu0 %v55
    %v124 = vpop.f32.mrf.mxu0
    %v125 = vadd.f32 %v81, %v124
    %126 = vmatmul.f32.gmra.mxu0 %v56
    %v127 = vpop.f32.mrf.mxu0
    %v128 = vadd.f32 %v81, %v127
    %129 = vmatmul.f32.gmra.mxu0 %v57
    %v130 = vpop.f32.mrf.mxu0
    %v131 = vadd.f32 %v81, %v130
    %132 = vmatmul.f32.gmra.mxu0 %v58
    %v133 = vpop.f32.mrf.mxu0
    %v134 = vadd.f32 %v81, %v133
    %135 = vmatmul.f32.gmra.mxu0 %v59
    %v136 = vpop.f32.mrf.mxu0
    %v137 = vadd.f32 %v81, %v136
    %138 = vmatmul.f32.gmra.mxu0 %v60
    %v139 = vpop.f32.mrf.mxu0
    %v140 = vadd.f32 %v81, %v139
    %141 = vmatmul.f32.gmra.mxu0 %v61
    %v142 = vpop.f32.mrf.mxu0
    %v143 = vadd.f32 %v81, %v142
    %144 = vmatmul.f32.gmra.mxu0 %v62
    %v145 = vpop.f32.mrf.mxu0
    %v146 = vadd.f32 %v81, %v145
    %147 = vdwg.mxu0
    %v148 = vmax.f32 %v101, 0.0
    %v149 = vmax.f32 %v104, 0.0
    %v150 = vmax.f32 %v107, 0.0
    %v151 = vmax.f32 %v110, 0.0
    %v152 = vmax.f32 %v113, 0.0
    %v153 = vmax.f32 %v116, 0.0
    %v154 = vmax.f32 %v119, 0.0
    %v155 = vmax.f32 %v122, 0.0
    %v156 = vmax.f32 %v125, 0.0
    %v157 = vmax.f32 %v128, 0.0
    %v158 = vmax.f32 %v131, 0.0
    %v159 = vmax.f32 %v134, 0.0
    %v160 = vmax.f32 %v137, 0.0
    %v161 = vmax.f32 %v140, 0.0
    %v162 = vmax.f32 %v143, 0.0
    %v163 = vmax.f32 %v146, 0.0
    %164 = vst [vmem:[#allocation7] sm:$0xff] %v148
    %165 = vst [vmem:[#allocation7 + $0x8] sm:$0xff] %v149
    %166 = vst [vmem:[#allocation7 + $0x10] sm:$0xff] %v150
    %167 = vst [vmem:[#allocation7 + $0x18] sm:$0xff] %v151
    %168 = vst [vmem:[#allocation7 + $0x20] sm:$0xff] %v152
    %169 = vst [vmem:[#allocation7 + $0x28] sm:$0xff] %v153
    %170 = vst [vmem:[#allocation7 + $0x30] sm:$0xff] %v154
    %171 = vst [vmem:[#allocation7 + $0x38] sm:$0xff] %v155
    %172 = vst [vmem:[#allocation7 + $0x40] sm:$0xff] %v156
    %173 = vst [vmem:[#allocation7 + $0x48] sm:$0xff] %v157
    %174 = vst [vmem:[#allocation7 + $0x50] sm:$0xff] %v158
    %175 = vst [vmem:[#allocation7 + $0x58] sm:$0xff] %v159
    %176 = vst [vmem:[#allocation7 + $0x60] sm:$0xff] %v160
    %177 = vst [vmem:[#allocation7 + $0x68] sm:$0xff] %v161
    %178 = vst [vmem:[#allocation7 + $0x70] sm:$0xff] %v162
    %179 = vst [vmem:[#allocation7 + $0x78] sm:$0xff] %v163
    // Predicated region
    $region22: #{tpu_custom_call.1} parent=1 // pred_check
      _
    $region23: #{tpu_custom_call.1} parent=1 // pred_check_branch
      %181 = sbr.rel (0) target = $region25
    $region24: #{tpu_custom_call.1} parent=1 // pred_region
      %183 = vsyncadd [#allocation4], 0
      %s184 = sshll.u32 [#allocation7], 4
      %s185 = int_to_ptr.vmem [resolvable:$true] %s184
      %s186 = sshll.u32 %s3, 4
      %s187 = int_to_ptr.hbm [resolvable:$true] %s186
      %192 = dma.vmem_to_hbm [thread:$0]  %s185, 2048, %s187, [#allocation4], 128, 128, 8
    $region25: #{tpu_custom_call.1} parent=1 // pred_fallthru
      _
    // Predicated region
    $region26: #{tpu_custom_call.1} parent=1 // pred_check
      _
    $region27: #{tpu_custom_call.1} parent=1 // pred_check_branch
      %194 = sbr.rel (0) target = $region29
    $region28: #{tpu_custom_call.1} parent=1 // pred_region
      %196 = dma.done [#allocation4], 2048
    $region29: #{tpu_custom_call.1} parent=1 // pred_fallthru
      _
    %197 = vsyncpa [#allocation3], 1
    %198 = vsyncpa [#allocation6], 1
    %199 = vsyncpa [#allocation4], 1

</llo_original>
